<compile_context>
chip_gen: v5e
topology: v5e:2x2
jax: 0.10.0
libtpu: 0.0.40
codegen_flags: <defaults>
</compile_context>

<pallas_src>
import functools

import jax
import jax.numpy as jnp
from jax.experimental import pallas as pl
from jax.experimental.pallas import tpu as pltpu


def _round_up(n: int, m: int) -> int:
    return ((n + m - 1) // m) * m


def _num_tensorcores_per_chip() -> int:
    """Best-effort detection of TensorCores per chip (2 on v7x, else 1)."""
    try:
        kind = jax.devices()[0].device_kind.lower()
        if "v7" in kind:
            return 2
    except Exception:  # pragma: no cover - detection is purely advisory
        pass
    return 1


def make_encoder_kernel(hidden_out_sizes, head_pad):
    """Whole Encoder.forward fused into one kernel.

    Ref order: x, W_hidden_0..W_hidden_{L-1}, W_head_fused, bias_packed, out
      x            : (TILE_B, in0_pad)           bf16  (feature dim lane-padded)
      W_hidden_j   : (in_j_pad, out_j_pad)       bf16  (pre-transposed, zero-padded)
      W_head_fused : (hidden_last_pad, head_pad) bf16  (means | log_var | zero-pad)
      bias_packed  : (L + 1, BMAX)               f32   (row j = bias of linear j)
      out          : (TILE_B, head_pad)          f32   (lane-dense slab)
    All `*_pad` sizes are multiples of 128, so every slice below is lane-dense.
    """
    num_hidden = len(hidden_out_sizes)

    def kernel(*refs):
        x_ref = refs[0]
        w_refs = refs[1 : 1 + num_hidden]
        head_w_ref = refs[1 + num_hidden]
        bias_ref = refs[2 + num_hidden]
        out_ref = refs[3 + num_hidden]

        h = x_ref[...]  # bf16 activations, lane-padded
        for j in range(num_hidden):
            out_j = hidden_out_sizes[j]  # multiple of 128
            # bf16 x bf16 -> f32 accumulation on the MXU.
            z = jnp.dot(h, w_refs[j][...], preferred_element_type=jnp.float32)
            b = bias_ref[j : j + 1, :out_j]  # f32, lane-aligned slice
            # Epilogue (bias + ReLU) in f32 (v5e-safe); cast to bf16 for next dot.
            h = jnp.maximum(z + b, 0.0).astype(jnp.bfloat16)

        # Fused means/log_var head: one matmul, one lane-dense store.
        zh = jnp.dot(h, head_w_ref[...], preferred_element_type=jnp.float32)
        out_ref[...] = zh + bias_ref[num_hidden : num_hidden + 1, :head_pad]

    return kernel


def init_encoder_params(key, layer_sizes, latent_size):
    """Deterministic init mimicking nn.Linear default (uniform +-1/sqrt(fan_in))."""
    params = []
    sizes = list(zip(layer_sizes[:-1], layer_sizes[1:]))
    n_lin = len(sizes) + 2  # hidden layers + means head + log_var head
    keys = jax.random.split(key, 2 * n_lin)
    k = 0

    def linear(in_size, out_size):
        nonlocal k
        bound = 1.0 / jnp.sqrt(jnp.float32(in_size))
        w = jax.random.uniform(
            keys[k], (out_size, in_size), jnp.float32, -bound, bound
        )
        b = jax.random.uniform(
            keys[k + 1], (out_size,), jnp.float32, -bound, bound
        )
        k += 2
        return w, b

    for in_size, out_size in sizes:
        params.append(linear(in_size, out_size))
    w_means = linear(layer_sizes[-1], latent_size)
    w_logvar = linear(layer_sizes[-1], latent_size)
    return params, w_means, w_logvar


def prepare_encoder_params(mlp_params, means_params, logvar_params, latent_size):
    """One-time parameter prep (outside the hot path):
      * transpose weights to (in, out), zero-pad both dims to multiples of 128,
        cast to bf16 (MXU-friendly, lane-dense, halves weight DMA);
      * fuse the two heads into one lane-padded matrix;
      * pack every bias into a single lane-padded f32 array.
    Zero-padded rows/columns contribute exactly 0 through matmul/ReLU, so the
    numerics are unchanged."""
    in_sizes = [w.shape[1] for (w, _) in mlp_params]
    out_sizes = [w.shape[0] for (w, _) in mlp_params]
    in_pads = [_round_up(s, 128) for s in in_sizes]
    out_pads = [_round_up(s, 128) for s in out_sizes]

    hidden_ws = []
    for j, (w, _) in enumerate(mlp_params):
        wt = jnp.zeros((in_pads[j], out_pads[j]), jnp.float32)
        wt = wt.at[: in_sizes[j], : out_sizes[j]].set(w.T)
        hidden_ws.append(wt.astype(jnp.bfloat16))
    hidden_ws = tuple(hidden_ws)

    hidden_last = out_sizes[-1]
    hidden_last_pad = out_pads[-1]
    head_pad = _round_up(2 * latent_size, 128)  # lane-dense head output width
    wm, bm = means_params
    wv, bv = logvar_params
    head_w = jnp.zeros((hidden_last_pad, head_pad), jnp.float32)
    head_w = head_w.at[:hidden_last, :latent_size].set(wm.T)
    head_w = head_w.at[:hidden_last, latent_size : 2 * latent_size].set(wv.T)
    head_w = head_w.astype(jnp.bfloat16)

    bmax = max(max(out_pads), head_pad)
    n_rows = len(out_pads) + 1
    bias_packed = jnp.zeros((n_rows, bmax), jnp.float32)
    for j, (_, b) in enumerate(mlp_params):
        bias_packed = bias_packed.at[j, : out_sizes[j]].set(b)
    bias_packed = bias_packed.at[n_rows - 1, :latent_size].set(bm)
    bias_packed = bias_packed.at[n_rows - 1, latent_size : 2 * latent_size].set(bv)

    return {"hidden_ws": hidden_ws, "head_w": head_w, "bias": bias_packed}


@functools.partial(jax.jit, static_argnames=("latent_size", "tile_b"))
def encoder_forward(x, hidden_ws, head_w, bias_packed, *, latent_size, tile_b=1024):
    B, D0 = x.shape
    num_hidden = len(hidden_ws)
    D0_pad = hidden_ws[0].shape[0]
    head_pad = head_w.shape[1]
    hidden_out_sizes = tuple(w.shape[1] for w in hidden_ws)

    # ---- Batch tiling (trace-time Python) -------------------------------
    # Big tiles amortize the ~0.35us/step overhead; round to 16 rows so the
    # bf16 sublane packing is clean; on v7x keep an even number of grid
    # steps so both TensorCores get work.
    ncores = _num_tensorcores_per_chip()
    b16 = _round_up(B, 16)
    steps = max(pl.cdiv(b16, tile_b), 1)
    steps = _round_up(steps, ncores)
    tb = _round_up(pl.cdiv(b16, steps), 16)
    b_pad = tb * steps

    xb = x.astype(jnp.bfloat16)
    if b_pad != B or D0_pad != D0:
        xb = jnp.pad(xb, ((0, b_pad - B), (0, D0_pad - D0)))

    # ---- Block specs -----------------------------------------------------
    in_specs = [pl.BlockSpec((tb, D0_pad), lambda i: (i, 0))]
    const_arrays = list(hidden_ws) + [head_w, bias_packed]
    for arr in const_arrays:
        # Constant index map -> VMEM-resident; single-buffered (never re-fetched).
        in_specs.append(
            pl.BlockSpec(arr.shape, lambda i: (0, 0), pipeline_mode=pl.Buffered(1))
        )

    # ---- VMEM budget (resident weights + double-buffered x/out tiles) ----
    weight_bytes = sum(int(a.size) * 2 for a in hidden_ws) + int(head_w.size) * 2
    bias_bytes = int(bias_packed.size) * 4
    tile_bytes = 2 * (tb * D0_pad * 2) + 2 * (tb * head_pad * 4)
    resident = weight_bytes + bias_bytes + tile_bytes
    vmem_limit = int(min(max(2 * resident, 32 * 1024 * 1024), 64 * 1024 * 1024))

    # ---- Cost estimate (advisory, helps XLA schedule this small call) ----
    dims = [D0_pad] + list(hidden_out_sizes) + [head_pad]
    flops = 2 * b_pad * sum(a * b for a, b in zip(dims[:-1], dims[1:]))
    bytes_accessed = (
        int(xb.size) * 2 + weight_bytes + bias_bytes + b_pad * head_pad * 4
    )
    cost = pl.CostEstimate(
        flops=flops, transcendentals=0, bytes_accessed=bytes_accessed
    )

    out = pl.pallas_call(
        make_encoder_kernel(hidden_out_sizes, head_pad),
        out_shape=jax.ShapeDtypeStruct((b_pad, head_pad), jnp.float32),
        grid=(steps,),
        in_specs=in_specs,
        out_specs=pl.BlockSpec((tb, head_pad), lambda i: (i, 0)),
        compiler_params=pltpu.CompilerParams(
            dimension_semantics=("parallel",),  # megacore sharding on v7x
            vmem_limit_bytes=vmem_limit,
        ),
        cost_estimate=cost,
    )(xb, *hidden_ws, head_w, bias_packed)

    means = out[:B, :latent_size]
    log_vars = out[:B, latent_size : 2 * latent_size]
    return means, log_vars


def encoder_reference(x, mlp_params, means_params, logvar_params):
    h = x
    for w, b in mlp_params:
        h = jnp.maximum(h @ w.T + b, 0.0)
    means = h @ means_params[0].T + means_params[1]
    log_vars = h @ logvar_params[0].T + logvar_params[1]
    return means, log_vars


if __name__ == "__main__":
    # MLP [64 -> 128 -> 32], latent 20 (consistent with the PyTorch module).
    layer_sizes = [64, 128, 32]
    latent_size = 20
    batch = 256

    key = jax.random.PRNGKey(0)
    k_param, k_x = jax.random.split(key)
    mlp_params, means_params, logvar_params = init_encoder_params(
        k_param, layer_sizes, latent_size
    )
    x = jax.random.normal(k_x, (batch, layer_sizes[0]), jnp.float32)

    prepared = prepare_encoder_params(
        mlp_params, means_params, logvar_params, latent_size
    )
    means, log_vars = encoder_forward(
        x,
        prepared["hidden_ws"],
        prepared["head_w"],
        prepared["bias"],
        latent_size=latent_size,
        tile_b=1024,
    )
    jax.block_until_ready((means, log_vars))

    # Sanity check against the f32 pure-JAX reference (kernel uses bf16 MXU
    # inputs with f32 accumulation, so allow a small tolerance).
    ref_means, ref_log_vars = encoder_reference(
        x, mlp_params, means_params, logvar_params
    )
    assert means.shape == (batch, latent_size)
    assert log_vars.shape == (batch, latent_size)
    assert jnp.allclose(means, ref_means, atol=5e-2, rtol=5e-2)
    assert jnp.allclose(log_vars, ref_log_vars, atol=5e-2, rtol=5e-2)

    print("KERNEL_OK")
</pallas_src>

<mosaic_0001>
module attributes {stable_mosaic.version = 11 : i64} {
  func.func @kernel(%arg0: i32, %arg1: memref<256x128xbf16, #tpu.memory_space<vmem>>, %arg2: memref<128x128xbf16, #tpu.memory_space<vmem>>, %arg3: memref<128x128xbf16, #tpu.memory_space<vmem>>, %arg4: memref<128x128xbf16, #tpu.memory_space<vmem>>, %arg5: memref<3x128xf32, #tpu.memory_space<vmem>>, %arg6: memref<256x128xf32, #tpu.memory_space<vmem>>) attributes {dimension_semantics = [#tpu.dimension_semantics<parallel>], iteration_bounds = array<i64: 1>, scalar_prefetch = 0 : i64, scratch_operands = 0 : i64, tpu.core_type = #tpu.core_type<tc>, window_params = [{transform_indices = @transform_0, window_bounds = array<i64: 256, 128>}, {pipeline_mode = #tpu.pipeline_mode<synchronous>, transform_indices = @transform_1, window_bounds = array<i64: 128, 128>}, {pipeline_mode = #tpu.pipeline_mode<synchronous>, transform_indices = @transform_2, window_bounds = array<i64: 128, 128>}, {pipeline_mode = #tpu.pipeline_mode<synchronous>, transform_indices = @transform_3, window_bounds = array<i64: 128, 128>}, {pipeline_mode = #tpu.pipeline_mode<synchronous>, transform_indices = @transform_4, window_bounds = array<i64: 3, 128>}, {transform_indices = @transform_5, window_bounds = array<i64: 256, 128>}]} {
    %c0 = arith.constant 0 : index
    %c0_0 = arith.constant 0 : index
    %0 = vector.load %arg1[%c0, %c0_0] : memref<256x128xbf16, #tpu.memory_space<vmem>>, vector<256x128xbf16>
    %c0_1 = arith.constant 0 : index
    %c0_2 = arith.constant 0 : index
    %1 = vector.load %arg2[%c0_1, %c0_2] : memref<128x128xbf16, #tpu.memory_space<vmem>>, vector<128x128xbf16>
    %cst = arith.constant dense<0.000000e+00> : vector<256x128xf32>
    %2 = tpu.matmul %0, %1, %cst {dimension_numbers = #tpu.dot_dimension_numbers<[1], [0], [0], [1], [0, 0, 1, 1], [], []>} : vector<256x128xbf16>, vector<128x128xbf16>, vector<256x128xf32> -> vector<256x128xf32>
    %c0_3 = arith.constant 0 : index
    %c0_4 = arith.constant 0 : index
    %3 = vector.load %arg5[%c0_3, %c0_4] : memref<3x128xf32, #tpu.memory_space<vmem>>, vector<1x128xf32>
    %4 = vector.broadcast %3 : vector<1x128xf32> to vector<256x128xf32>
    %5 = arith.addf %2, %4 : vector<256x128xf32>
    %cst_5 = arith.constant 0.000000e+00 : f32
    %6 = vector.broadcast %cst_5 : f32 to vector<256x128xf32>
    %7 = arith.maximumf %5, %6 : vector<256x128xf32>
    %8 = arith.truncf %7 : vector<256x128xf32> to vector<256x128xbf16>
    %c0_6 = arith.constant 0 : index
    %c0_7 = arith.constant 0 : index
    %9 = vector.load %arg3[%c0_6, %c0_7] : memref<128x128xbf16, #tpu.memory_space<vmem>>, vector<128x128xbf16>
    %cst_8 = arith.constant dense<0.000000e+00> : vector<256x128xf32>
    %10 = tpu.matmul %8, %9, %cst_8 {dimension_numbers = #tpu.dot_dimension_numbers<[1], [0], [0], [1], [0, 0, 1, 1], [], []>} : vector<256x128xbf16>, vector<128x128xbf16>, vector<256x128xf32> -> vector<256x128xf32>
    %c1 = arith.constant 1 : index
    %c0_9 = arith.constant 0 : index
    %11 = vector.load %arg5[%c1, %c0_9] : memref<3x128xf32, #tpu.memory_space<vmem>>, vector<1x128xf32>
    %12 = vector.broadcast %11 : vector<1x128xf32> to vector<256x128xf32>
    %13 = arith.addf %10, %12 : vector<256x128xf32>
    %cst_10 = arith.constant 0.000000e+00 : f32
    %14 = vector.broadcast %cst_10 : f32 to vector<256x128xf32>
    %15 = arith.maximumf %13, %14 : vector<256x128xf32>
    %16 = arith.truncf %15 : vector<256x128xf32> to vector<256x128xbf16>
    %c0_11 = arith.constant 0 : index
    %c0_12 = arith.constant 0 : index
    %17 = vector.load %arg4[%c0_11, %c0_12] : memref<128x128xbf16, #tpu.memory_space<vmem>>, vector<128x128xbf16>
    %cst_13 = arith.constant dense<0.000000e+00> : vector<256x128xf32>
    %18 = tpu.matmul %16, %17, %cst_13 {dimension_numbers = #tpu.dot_dimension_numbers<[1], [0], [0], [1], [0, 0, 1, 1], [], []>} : vector<256x128xbf16>, vector<128x128xbf16>, vector<256x128xf32> -> vector<256x128xf32>
    %c2 = arith.constant 2 : index
    %c0_14 = arith.constant 0 : index
    %19 = vector.load %arg5[%c2, %c0_14] : memref<3x128xf32, #tpu.memory_space<vmem>>, vector<1x128xf32>
    %20 = vector.broadcast %19 : vector<1x128xf32> to vector<256x128xf32>
    %21 = arith.addf %18, %20 : vector<256x128xf32>
    %c0_15 = arith.constant 0 : index
    %c0_16 = arith.constant 0 : index
    %22 = vector.load %arg6[%c0_15, %c0_16] : memref<256x128xf32, #tpu.memory_space<vmem>>, vector<256x128xf32>
    tpu.vector_store %arg6[%c0_15, %c0_16], %21 {strides = array<i32>} : memref<256x128xf32, #tpu.memory_space<vmem>>, vector<256x128xf32>,
    return
  }
  func.func @transform_0(%arg0: i32) -> (i32, i32) {
    %c0_i32 = arith.constant 0 : i32
    %c0_i32_0 = arith.constant 0 : i32
    return %arg0, %c0_i32 : i32, i32
  }
  func.func @transform_1(%arg0: i32) -> (i32, i32) {
    %c0_i32 = arith.constant 0 : i32
    %c0_i32_0 = arith.constant 0 : i32
    %c0_i32_1 = arith.constant 0 : i32
    return %c0_i32, %c0_i32_0 : i32, i32
  }
  func.func @transform_2(%arg0: i32) -> (i32, i32) {
    %c0_i32 = arith.constant 0 : i32
    %c0_i32_0 = arith.constant 0 : i32
    %c0_i32_1 = arith.constant 0 : i32
    return %c0_i32, %c0_i32_0 : i32, i32
  }
  func.func @transform_3(%arg0: i32) -> (i32, i32) {
    %c0_i32 = arith.constant 0 : i32
    %c0_i32_0 = arith.constant 0 : i32
    %c0_i32_1 = arith.constant 0 : i32
    return %c0_i32, %c0_i32_0 : i32, i32
  }
  func.func @transform_4(%arg0: i32) -> (i32, i32) {
    %c0_i32 = arith.constant 0 : i32
    %c0_i32_0 = arith.constant 0 : i32
    %c0_i32_1 = arith.constant 0 : i32
    return %c0_i32, %c0_i32_0 : i32, i32
  }
  func.func @transform_5(%arg0: i32) -> (i32, i32) {
    %c0_i32 = arith.constant 0 : i32
    %c0_i32_0 = arith.constant 0 : i32
    return %arg0, %c0_i32 : i32, i32
  }
}

</mosaic_0001>

<llo_original>
// kernel: encoder_forward.1
$region0: #{encoder_forward.1}
  #allocation0 [shape = 'u32[]', space=smem, size = 0x4, offset = 0x4, fixed_abs, tag = 'smem constant byte address 0x4 - core index']
  #allocation1 [shape = 'u32[72,128]{1,0:T(1,128)}', space=vmem, size = 0x9000, scoped, tag = 'internal scratch']
  %s0 = inlined_call_operand.vmem [shape: bf16[256,128], index: 0, kind: input, shape index: {}]
  %s1 = inlined_call_operand.vmem [shape: bf16[128,128], index: 1, kind: input, shape index: {}]
  %s2 = inlined_call_operand.vmem [shape: bf16[128,128], index: 2, kind: input, shape index: {}]
  %s3 = inlined_call_operand.vmem [shape: bf16[128,128], index: 3, kind: input, shape index: {}]
  %s4 = inlined_call_operand.vmem [shape: f32[3,128], index: 4, kind: input, shape index: {}]
  %s5 = inlined_call_operand.vmem [shape: f32[256,128], index: 5, kind: output, shape index: {}]
  %s6 = sld [smem:[#allocation0]]
  $region30: #{encoder_forward.1} parent=0
    _
  %s8 = ssub.s32 1, %s6
  %s9 = scalar_select 0, %s8, %s6
  // Predicated region
  $region2: #{encoder_forward.1} parent=0 // pred_check
    _
  $region3: #{encoder_forward.1} parent=0 // pred_check_branch
    %11 = sbr.rel (0) target = $region5
  $region4: #{encoder_forward.1} parent=0 // pred_region
    _
  $region5: #{encoder_forward.1} parent=0 // pred_fallthru
    _
  // Predicated region
  $region6: #{encoder_forward.1} parent=0 // pred_check
    _
  $region7: #{encoder_forward.1} parent=0 // pred_check_branch
    %13 = sbr.rel (0) target = $region9
  $region8: #{encoder_forward.1} parent=0 // pred_region
    _
  $region9: #{encoder_forward.1} parent=0 // pred_fallthru
    _
  // Predicated region
  $region10: #{encoder_forward.1} parent=0 // pred_check
    _
  $region11: #{encoder_forward.1} parent=0 // pred_check_branch
    %15 = sbr.rel (0) target = $region13
  $region12: #{encoder_forward.1} parent=0 // pred_region
    _
  $region13: #{encoder_forward.1} parent=0 // pred_fallthru
    _
  // Predicated region
  $region14: #{encoder_forward.1} parent=0 // pred_check
    _
  $region15: #{encoder_forward.1} parent=0 // pred_check_branch
    %17 = sbr.rel (0) target = $region17
  $region16: #{encoder_forward.1} parent=0 // pred_region
    _
  $region17: #{encoder_forward.1} parent=0 // pred_fallthru
    _
  // Predicated region
  $region18: #{encoder_forward.1} parent=0 // pred_check
    _
  $region19: #{encoder_forward.1} parent=0 // pred_check_branch
    %19 = sbr.rel (0) target = $region21
  $region20: #{encoder_forward.1} parent=0 // pred_region
    _
  $region21: #{encoder_forward.1} parent=0 // pred_fallthru
    _
  %v20 = vld [vmem:[%s0] sm:$0xf]
  %v21 = vld [vmem:[%s0 + $0x4] sm:$0xf]
  %v22 = vld [vmem:[%s0 + $0x8] sm:$0xf]
  %v23 = vld [vmem:[%s0 + $0xc] sm:$0xf]
  %v24 = vld [vmem:[%s0 + $0x10] sm:$0xf]
  %v25 = vld [vmem:[%s0 + $0x14] sm:$0xf]
  %v26 = vld [vmem:[%s0 + $0x18] sm:$0xf]
  %v27 = vld [vmem:[%s0 + $0x1c] sm:$0xf]
  %v28 = vld [vmem:[%s0 + $0x20] sm:$0xf]
  %v29 = vld [vmem:[%s0 + $0x24] sm:$0xf]
  %v30 = vld [vmem:[%s0 + $0x28] sm:$0xf]
  %v31 = vld [vmem:[%s0 + $0x2c] sm:$0xf]
  %v32 = vld [vmem:[%s0 + $0x30] sm:$0xf]
  %v33 = vld [vmem:[%s0 + $0x34] sm:$0xf]
  %v34 = vld [vmem:[%s0 + $0x38] sm:$0xf]
  %v35 = vld [vmem:[%s0 + $0x3c] sm:$0xf]
  %v36 = vld [vmem:[%s0 + $0x40] sm:$0xf]
  %v37 = vld [vmem:[%s0 + $0x44] sm:$0xf]
  %v38 = vld [vmem:[%s0 + $0x48] sm:$0xf]
  %v39 = vld [vmem:[%s0 + $0x4c] sm:$0xf]
  %v40 = vld [vmem:[%s0 + $0x50] sm:$0xf]
  %v41 = vld [vmem:[%s0 + $0x54] sm:$0xf]
  %v42 = vld [vmem:[%s0 + $0x58] sm:$0xf]
  %v43 = vld [vmem:[%s0 + $0x5c] sm:$0xf]
  %v44 = vld [vmem:[%s0 + $0x60] sm:$0xf]
  %v45 = vld [vmem:[%s0 + $0x64] sm:$0xf]
  %v46 = vld [vmem:[%s0 + $0x68] sm:$0xf]
  %v47 = vld [vmem:[%s0 + $0x6c] sm:$0xf]
  %v48 = vld [vmem:[%s0 + $0x70] sm:$0xf]
  %v49 = vld [vmem:[%s0 + $0x74] sm:$0xf]
  %v50 = vld [vmem:[%s0 + $0x78] sm:$0xf]
  %v51 = vld [vmem:[%s0 + $0x7c] sm:$0xf]
  %v52 = vld [vmem:[%s1] sm:$0xf]
  %v53 = vld [vmem:[%s1 + $0x4] sm:$0xf]
  %v54 = vld [vmem:[%s1 + $0x8] sm:$0xf]
  %v55 = vld [vmem:[%s1 + $0xc] sm:$0xf]
  %v56 = vld [vmem:[%s1 + $0x10] sm:$0xf]
  %v57 = vld [vmem:[%s1 + $0x14] sm:$0xf]
  %v58 = vld [vmem:[%s1 + $0x18] sm:$0xf]
  %v59 = vld [vmem:[%s1 + $0x1c] sm:$0xf]
  %v60 = vld [vmem:[%s1 + $0x20] sm:$0xf]
  %v61 = vld [vmem:[%s1 + $0x24] sm:$0xf]
  %v62 = vld [vmem:[%s1 + $0x28] sm:$0xf]
  %v63 = vld [vmem:[%s1 + $0x2c] sm:$0xf]
  %v64 = vld [vmem:[%s1 + $0x30] sm:$0xf]
  %v65 = vld [vmem:[%s1 + $0x34] sm:$0xf]
  %v66 = vld [vmem:[%s1 + $0x38] sm:$0xf]
  %v67 = vld [vmem:[%s1 + $0x3c] sm:$0xf]
  %v68 = vld [vmem:[%s4] sm:$0x1]
  %v69 = vperm.slane %v68, 0
  %v102 = vunpack.c.l.b16 %v20
  %v103 = vunpack.c.l.b16 %v21
  %v104 = vunpack.c.l.b16 %v22
  %v105 = vunpack.c.l.b16 %v23
  %v106 = vunpack.c.l.b16 %v24
  %v107 = vunpack.c.l.b16 %v25
  %v108 = vunpack.c.l.b16 %v26
  %v109 = vunpack.c.l.b16 %v27
  %v110 = vunpack.c.l.b16 %v28
  %v111 = vunpack.c.l.b16 %v29
  %v112 = vunpack.c.l.b16 %v30
  %v113 = vunpack.c.l.b16 %v31
  %v114 = vunpack.c.l.b16 %v32
  %v115 = vunpack.c.l.b16 %v33
  %v116 = vunpack.c.l.b16 %v34
  %v117 = vunpack.c.l.b16 %v35
  %v118 = vunpack.c.l.b16 %v36
  %v119 = vunpack.c.l.b16 %v37
  %v120 = vunpack.c.l.b16 %v38
  %v121 = vunpack.c.l.b16 %v39
  %v122 = vunpack.c.l.b16 %v40
  %v123 = vunpack.c.l.b16 %v41
  %v124 = vunpack.c.l.b16 %v42
  %v125 = vunpack.c.l.b16 %v43
  %v126 = vunpack.c.l.b16 %v44
  %v127 = vunpack.c.l.b16 %v45
  %v128 = vunpack.c.l.b16 %v46
  %v129 = vunpack.c.l.b16 %v47
  %v130 = vunpack.c.l.b16 %v48
  %v131 = vunpack.c.l.b16 %v49
  %v132 = vunpack.c.l.b16 %v50
  %v133 = vunpack.c.l.b16 %v51
  %v134 = vpack.c.b16 %v103, %v102
  %v135 = vpack.c.b16 %v105, %v104
  %v136 = vpack.c.b16 %v107, %v106
  %v137 = vpack.c.b16 %v109, %v108
  %v138 = vpack.c.b16 %v111, %v110
  %v139 = vpack.c.b16 %v113, %v112
  %v140 = vpack.c.b16 %v115, %v114
  %v141 = vpack.c.b16 %v117, %v116
  %v142 = vpack.c.b16 %v119, %v118
  %v143 = vpack.c.b16 %v121, %v120
  %v144 = vpack.c.b16 %v123, %v122
  %v145 = vpack.c.b16 %v125, %v124
  %v146 = vpack.c.b16 %v127, %v126
  %v147 = vpack.c.b16 %v129, %v128
  %v148 = vpack.c.b16 %v131, %v130
  %v149 = vpack.c.b16 %v133, %v132
  %v182 = vunpack.c.l.b16 %v52
  %v183 = vunpack.c.l.b16 %v53
  %v184 = vunpack.c.l.b16 %v54
  %v185 = vunpack.c.l.b16 %v55
  %v186 = vunpack.c.l.b16 %v56
  %v187 = vunpack.c.l.b16 %v57
  %v188 = vunpack.c.l.b16 %v58
  %v189 = vunpack.c.l.b16 %v59
  %v190 = vunpack.c.l.b16 %v60
  %v191 = vunpack.c.l.b16 %v61
  %v192 = vunpack.c.l.b16 %v62
  %v193 = vunpack.c.l.b16 %v63
  %v194 = vunpack.c.l.b16 %v64
  %v195 = vunpack.c.l.b16 %v65
  %v196 = vunpack.c.l.b16 %v66
  %v197 = vunpack.c.l.b16 %v67
  %v198 = vpack.c.b16 %v183, %v182
  %v199 = vpack.c.b16 %v185, %v184
  %v200 = vpack.c.b16 %v187, %v186
  %v201 = vpack.c.b16 %v189, %v188
  %v202 = vpack.c.b16 %v191, %v190
  %v203 = vpack.c.b16 %v193, %v192
  %v204 = vpack.c.b16 %v195, %v194
  %v205 = vpack.c.b16 %v197, %v196
  %214 = vmatpush.bf16.msra.mxu0 %v205
  %215 = vmatpush.bf16.msra.mxu0 %v204
  %216 = vmatpush.bf16.msra.mxu0 %v203
  %217 = vmatpush.bf16.msra.mxu0 %v202
  %218 = vmatpush.bf16.msra.mxu0 %v201
  %219 = vmatpush.bf16.msra.mxu0 %v200
  %220 = vmatpush.bf16.msra.mxu0 %v199
  %221 = vmatpush.bf16.msra.mxu0 %v198
  %222 = vmatmul.bf16.gmra.mxu0 %v134
  %v223 = vpop.f32.mrf.mxu0
  %v224 = vadd.f32 %v69, %v223
  %v225 = vpop.f32.mrf.mxu0
  %v226 = vadd.f32 %v69, %v225
  %227 = vmatmul.bf16.gmra.mxu0 %v135
  %v228 = vpop.f32.mrf.mxu0
  %v229 = vadd.f32 %v69, %v228
  %v230 = vpop.f32.mrf.mxu0
  %v231 = vadd.f32 %v69, %v230
  %232 = vmatmul.bf16.gmra.mxu0 %v136
  %v233 = vpop.f32.mrf.mxu0
  %v234 = vadd.f32 %v69, %v233
  %v235 = vpop.f32.mrf.mxu0
  %v236 = vadd.f32 %v69, %v235
  %237 = vmatmul.bf16.gmra.mxu0 %v137
  %v238 = vpop.f32.mrf.mxu0
  %v239 = vadd.f32 %v69, %v238
  %v240 = vpop.f32.mrf.mxu0
  %v241 = vadd.f32 %v69, %v240
  %242 = vmatmul.bf16.gmra.mxu0 %v138
  %v243 = vpop.f32.mrf.mxu0
  %v244 = vadd.f32 %v69, %v243
  %v245 = vpop.f32.mrf.mxu0
  %v246 = vadd.f32 %v69, %v245
  %247 = vmatmul.bf16.gmra.mxu0 %v139
  %v248 = vpop.f32.mrf.mxu0
  %v249 = vadd.f32 %v69, %v248
  %v250 = vpop.f32.mrf.mxu0
  %v251 = vadd.f32 %v69, %v250
  %252 = vmatmul.bf16.gmra.mxu0 %v140
  %v253 = vpop.f32.mrf.mxu0
  %v254 = vadd.f32 %v69, %v253
  %v255 = vpop.f32.mrf.mxu0
  %v256 = vadd.f32 %v69, %v255
  %257 = vmatmul.bf16.gmra.mxu0 %v141
  %v258 = vpop.f32.mrf.mxu0
  %v259 = vadd.f32 %v69, %v258
  %v260 = vpop.f32.mrf.mxu0
  %v261 = vadd.f32 %v69, %v260
  %262 = vmatmul.bf16.gmra.mxu0 %v142
  %v263 = vpop.f32.mrf.mxu0
  %v264 = vadd.f32 %v69, %v263
  %v265 = vpop.f32.mrf.mxu0
  %v266 = vadd.f32 %v69, %v265
  %267 = vmatmul.bf16.gmra.mxu0 %v143
  %v268 = vpop.f32.mrf.mxu0
  %v269 = vadd.f32 %v69, %v268
  %v270 = vpop.f32.mrf.mxu0
  %v271 = vadd.f32 %v69, %v270
  %272 = vmatmul.bf16.gmra.mxu0 %v144
  %v273 = vpop.f32.mrf.mxu0
  %v274 = vadd.f32 %v69, %v273
  %v275 = vpop.f32.mrf.mxu0
  %v276 = vadd.f32 %v69, %v275
  %277 = vmatmul.bf16.gmra.mxu0 %v145
  %v278 = vpop.f32.mrf.mxu0
  %v279 = vadd.f32 %v69, %v278
  %v280 = vpop.f32.mrf.mxu0
  %v281 = vadd.f32 %v69, %v280
  %282 = vmatmul.bf16.gmra.mxu0 %v146
  %v283 = vpop.f32.mrf.mxu0
  %v284 = vadd.f32 %v69, %v283
  %v285 = vpop.f32.mrf.mxu0
  %v286 = vadd.f32 %v69, %v285
  %287 = vmatmul.bf16.gmra.mxu0 %v147
  %v288 = vpop.f32.mrf.mxu0
  %v289 = vadd.f32 %v69, %v288
  %v290 = vpop.f32.mrf.mxu0
  %v291 = vadd.f32 %v69, %v290
  %292 = vmatmul.bf16.gmra.mxu0 %v148
  %v293 = vpop.f32.mrf.mxu0
  %v294 = vadd.f32 %v69, %v293
  %v295 = vpop.f32.mrf.mxu0
  %v296 = vadd.f32 %v69, %v295
  %297 = vmatmul.bf16.gmra.mxu0 %v149
  %v298 = vpop.f32.mrf.mxu0
  %v299 = vadd.f32 %v69, %v298
  %v300 = vpop.f32.mrf.mxu0
  %v301 = vadd.f32 %v69, %v300
  %302 = vdwg.mxu0
  %v303 = vmax.f32 %v224, 0.0
  %v304 = vmax.f32 %v226, 0.0
  %v305 = vmax.f32 %v229, 0.0
  %v306 = vmax.f32 %v231, 0.0
  %v307 = vmax.f32 %v234, 0.0
  %v308 = vmax.f32 %v236, 0.0
  %v309 = vmax.f32 %v239, 0.0
  %v310 = vmax.f32 %v241, 0.0
  %v311 = vmax.f32 %v244, 0.0
  %v312 = vmax.f32 %v246, 0.0
  %v313 = vmax.f32 %v249, 0.0
  %v314 = vmax.f32 %v251, 0.0
  %v315 = vmax.f32 %v254, 0.0
  %v316 = vmax.f32 %v256, 0.0
  %v317 = vmax.f32 %v259, 0.0
  %v318 = vmax.f32 %v261, 0.0
  %v319 = vmax.f32 %v264, 0.0
  %v320 = vmax.f32 %v266, 0.0
  %v321 = vmax.f32 %v269, 0.0
  %v322 = vmax.f32 %v271, 0.0
  %v323 = vmax.f32 %v274, 0.0
  %v324 = vmax.f32 %v276, 0.0
  %v325 = vmax.f32 %v279, 0.0
  %v326 = vmax.f32 %v281, 0.0
  %v327 = vmax.f32 %v284, 0.0
  %v328 = vmax.f32 %v286, 0.0
  %v329 = vmax.f32 %v289, 0.0
  %v330 = vmax.f32 %v291, 0.0
  %v331 = vmax.f32 %v294, 0.0
  %v332 = vmax.f32 %v296, 0.0
  %v333 = vmax.f32 %v299, 0.0
  %v334 = vmax.f32 %v301, 0.0
  %v335 = vpack.c.bf16 %v304, %v303
  %v336 = vpack.c.bf16 %v306, %v305
  %v337 = vpack.c.bf16 %v308, %v307
  %v338 = vpack.c.bf16 %v310, %v309
  %v339 = vpack.c.bf16 %v312, %v311
  %v340 = vpack.c.bf16 %v314, %v313
  %v341 = vpack.c.bf16 %v316, %v315
  %v342 = vpack.c.bf16 %v318, %v317
  %v343 = vpack.c.bf16 %v320, %v319
  %v344 = vpack.c.bf16 %v322, %v321
  %v345 = vpack.c.bf16 %v324, %v323
  %v346 = vpack.c.bf16 %v326, %v325
  %v347 = vpack.c.bf16 %v328, %v327
  %v348 = vpack.c.bf16 %v330, %v329
  %v349 = vpack.c.bf16 %v332, %v331
  %v350 = vpack.c.bf16 %v334, %v333
  %v351 = vld [vmem:[%s2] sm:$0xf]
  %v352 = vld [vmem:[%s2 + $0x4] sm:$0xf]
  %v353 = vld [vmem:[%s2 + $0x8] sm:$0xf]
  %v354 = vld [vmem:[%s2 + $0xc] sm:$0xf]
  %v355 = vld [vmem:[%s2 + $0x10] sm:$0xf]
  %v356 = vld [vmem:[%s2 + $0x14] sm:$0xf]
  %v357 = vld [vmem:[%s2 + $0x18] sm:$0xf]
  %v358 = vld [vmem:[%s2 + $0x1c] sm:$0xf]
  %v359 = vld [vmem:[%s2 + $0x20] sm:$0xf]
  %v360 = vld [vmem:[%s2 + $0x24] sm:$0xf]
  %v361 = vld [vmem:[%s2 + $0x28] sm:$0xf]
  %v362 = vld [vmem:[%s2 + $0x2c] sm:$0xf]
  %v363 = vld [vmem:[%s2 + $0x30] sm:$0xf]
  %v364 = vld [vmem:[%s2 + $0x34] sm:$0xf]
  %v365 = vld [vmem:[%s2 + $0x38] sm:$0xf]
  %v366 = vld [vmem:[%s2 + $0x3c] sm:$0xf]
  %v367 = vld [vmem:[%s4 + $0x1] sm:$0x1]
  %v368 = vperm.slane %v367, 0
  %v385 = vunpack.c.l.b16 %v351
  %v386 = vunpack.c.l.b16 %v352
  %v387 = vunpack.c.l.b16 %v353
  %v388 = vunpack.c.l.b16 %v354
  %v389 = vunpack.c.l.b16 %v355
  %v390 = vunpack.c.l.b16 %v356
  %v391 = vunpack.c.l.b16 %v357
  %v392 = vunpack.c.l.b16 %v358
  %v393 = vunpack.c.l.b16 %v359
  %v394 = vunpack.c.l.b16 %v360
  %v395 = vunpack.c.l.b16 %v361
  %v396 = vunpack.c.l.b16 %v362
  %v397 = vunpack.c.l.b16 %v363
  %v398 = vunpack.c.l.b16 %v364
  %v399 = vunpack.c.l.b16 %v365
  %v400 = vunpack.c.l.b16 %v366
  %v401 = vpack.c.b16 %v386, %v385
  %v402 = vpack.c.b16 %v388, %v387
  %v403 = vpack.c.b16 %v390, %v389
  %v404 = vpack.c.b16 %v392, %v391
  %v405 = vpack.c.b16 %v394, %v393
  %v406 = vpack.c.b16 %v396, %v395
  %v407 = vpack.c.b16 %v398, %v397
  %v408 = vpack.c.b16 %v400, %v399
  %417 = vmatpush.bf16.msra.mxu0 %v408
  %418 = vmatpush.bf16.msra.mxu0 %v407
  %419 = vmatpush.bf16.msra.mxu0 %v406
  %420 = vmatpush.bf16.msra.mxu0 %v405
  %421 = vmatpush.bf16.msra.mxu0 %v404
  %422 = vmatpush.bf16.msra.mxu0 %v403
  %423 = vmatpush.bf16.msra.mxu0 %v402
  %424 = vmatpush.bf16.msra.mxu0 %v401
  %425 = vmatmul.bf16.gmra.mxu0 %v335
  %v426 = vpop.f32.mrf.mxu0
  %v427 = vadd.f32 %v368, %v426
  %v428 = vpop.f32.mrf.mxu0
  %v429 = vadd.f32 %v368, %v428
  %430 = vmatmul.bf16.gmra.mxu0 %v336
  %v431 = vpop.f32.mrf.mxu0
  %v432 = vadd.f32 %v368, %v431
  %v433 = vpop.f32.mrf.mxu0
  %v434 = vadd.f32 %v368, %v433
  %435 = vmatmul.bf16.gmra.mxu0 %v337
  %v436 = vpop.f32.mrf.mxu0
  %v437 = vadd.f32 %v368, %v436
  %v438 = vpop.f32.mrf.mxu0
  %v439 = vadd.f32 %v368, %v438
  %440 = vmatmul.bf16.gmra.mxu0 %v338
  %v441 = vpop.f32.mrf.mxu0
  %v442 = vadd.f32 %v368, %v441
  %v443 = vpop.f32.mrf.mxu0
  %v444 = vadd.f32 %v368, %v443
  %445 = vmatmul.bf16.gmra.mxu0 %v339
  %v446 = vpop.f32.mrf.mxu0
  %v447 = vadd.f32 %v368, %v446
  %v448 = vpop.f32.mrf.mxu0
  %v449 = vadd.f32 %v368, %v448
  %450 = vmatmul.bf16.gmra.mxu0 %v340
  %v451 = vpop.f32.mrf.mxu0
  %v452 = vadd.f32 %v368, %v451
  %v453 = vpop.f32.mrf.mxu0
  %v454 = vadd.f32 %v368, %v453
  %455 = vmatmul.bf16.gmra.mxu0 %v341
  %v456 = vpop.f32.mrf.mxu0
  %v457 = vadd.f32 %v368, %v456
  %v458 = vpop.f32.mrf.mxu0
  %v459 = vadd.f32 %v368, %v458
  %460 = vmatmul.bf16.gmra.mxu0 %v342
  %v461 = vpop.f32.mrf.mxu0
  %v462 = vadd.f32 %v368, %v461
  %v463 = vpop.f32.mrf.mxu0
  %v464 = vadd.f32 %v368, %v463
  %465 = vmatmul.bf16.gmra.mxu0 %v343
  %v466 = vpop.f32.mrf.mxu0
  %v467 = vadd.f32 %v368, %v466
  %v468 = vpop.f32.mrf.mxu0
  %v469 = vadd.f32 %v368, %v468
  %470 = vmatmul.bf16.gmra.mxu0 %v344
  %v471 = vpop.f32.mrf.mxu0
  %v472 = vadd.f32 %v368, %v471
  %v473 = vpop.f32.mrf.mxu0
  %v474 = vadd.f32 %v368, %v473
  %475 = vmatmul.bf16.gmra.mxu0 %v345
  %v476 = vpop.f32.mrf.mxu0
  %v477 = vadd.f32 %v368, %v476
  %v478 = vpop.f32.mrf.mxu0
  %v479 = vadd.f32 %v368, %v478
  %480 = vmatmul.bf16.gmra.mxu0 %v346
  %v481 = vpop.f32.mrf.mxu0
  %v482 = vadd.f32 %v368, %v481
  %v483 = vpop.f32.mrf.mxu0
  %v484 = vadd.f32 %v368, %v483
  %485 = vmatmul.bf16.gmra.mxu0 %v347
  %v486 = vpop.f32.mrf.mxu0
  %v487 = vadd.f32 %v368, %v486
  %v488 = vpop.f32.mrf.mxu0
  %v489 = vadd.f32 %v368, %v488
  %490 = vmatmul.bf16.gmra.mxu0 %v348
  %v491 = vpop.f32.mrf.mxu0
  %v492 = vadd.f32 %v368, %v491
  %v493 = vpop.f32.mrf.mxu0
  %v494 = vadd.f32 %v368, %v493
  %495 = vmatmul.bf16.gmra.mxu0 %v349
  %v496 = vpop.f32.mrf.mxu0
  %v497 = vadd.f32 %v368, %v496
  %v498 = vpop.f32.mrf.mxu0
  %v499 = vadd.f32 %v368, %v498
  %500 = vmatmul.bf16.gmra.mxu0 %v350
  %v501 = vpop.f32.mrf.mxu0
  %v502 = vadd.f32 %v368, %v501
  %v503 = vpop.f32.mrf.mxu0
  %v504 = vadd.f32 %v368, %v503
  %505 = vdwg.mxu0
  %v506 = vmax.f32 %v427, 0.0
  %v507 = vmax.f32 %v429, 0.0
  %v508 = vmax.f32 %v432, 0.0
  %v509 = vmax.f32 %v434, 0.0
  %v510 = vmax.f32 %v437, 0.0
  %v511 = vmax.f32 %v439, 0.0
  %v512 = vmax.f32 %v442, 0.0
  %v513 = vmax.f32 %v444, 0.0
  %v514 = vmax.f32 %v447, 0.0
  %v515 = vmax.f32 %v449, 0.0
  %v516 = vmax.f32 %v452, 0.0
  %v517 = vmax.f32 %v454, 0.0
  %v518 = vmax.f32 %v457, 0.0
  %v519 = vmax.f32 %v459, 0.0
  %v520 = vmax.f32 %v462, 0.0
  %v521 = vmax.f32 %v464, 0.0
  %v522 = vmax.f32 %v467, 0.0
  %v523 = vmax.f32 %v469, 0.0
  %v524 = vmax.f32 %v472, 0.0
  %v525 = vmax.f32 %v474, 0.0
  %v526 = vmax.f32 %v477, 0.0
  %v527 = vmax.f32 %v479, 0.0
  %v528 = vmax.f32 %v482, 0.0
  %v529 = vmax.f32 %v484, 0.0
  %v530 = vmax.f32 %v487, 0.0
  %v531 = vmax.f32 %v489, 0.0
  %v532 = vmax.f32 %v492, 0.0
  %v533 = vmax.f32 %v494, 0.0
  %v534 = vmax.f32 %v497, 0.0
  %v535 = vmax.f32 %v499, 0.0
  %v536 = vmax.f32 %v502, 0.0
  %v537 = vmax.f32 %v504, 0.0
  %v538 = vpack.c.bf16 %v507, %v506
  %v539 = vpack.c.bf16 %v509, %v508
  %v540 = vpack.c.bf16 %v511, %v510
  %v541 = vpack.c.bf16 %v513, %v512
  %v542 = vpack.c.bf16 %v515, %v514
  %v543 = vpack.c.bf16 %v517, %v516
  %v544 = vpack.c.bf16 %v519, %v518
  %v545 = vpack.c.bf16 %v521, %v520
  %v546 = vpack.c.bf16 %v523, %v522
  %v547 = vpack.c.bf16 %v525, %v524
  %v548 = vpack.c.bf16 %v527, %v526
  %v549 = vpack.c.bf16 %v529, %v528
  %v550 = vpack.c.bf16 %v531, %v530
  %v551 = vpack.c.bf16 %v533, %v532
  %v552 = vpack.c.bf16 %v535, %v534
  %v553 = vpack.c.bf16 %v537, %v536
  %v554 = vld [vmem:[%s3] sm:$0xf]
  %v555 = vld [vmem:[%s3 + $0x4] sm:$0xf]
  %v556 = vld [vmem:[%s3 + $0x8] sm:$0xf]
  %v557 = vld [vmem:[%s3 + $0xc] sm:$0xf]
  %v558 = vld [vmem:[%s3 + $0x10] sm:$0xf]
  %v559 = vld [vmem:[%s3 + $0x14] sm:$0xf]
  %v560 = vld [vmem:[%s3 + $0x18] sm:$0xf]
  %v561 = vld [vmem:[%s3 + $0x1c] sm:$0xf]
  %v562 = vld [vmem:[%s3 + $0x20] sm:$0xf]
  %v563 = vld [vmem:[%s3 + $0x24] sm:$0xf]
  %v564 = vld [vmem:[%s3 + $0x28] sm:$0xf]
  %v565 = vld [vmem:[%s3 + $0x2c] sm:$0xf]
  %v566 = vld [vmem:[%s3 + $0x30] sm:$0xf]
  %v567 = vld [vmem:[%s3 + $0x34] sm:$0xf]
  %v568 = vld [vmem:[%s3 + $0x38] sm:$0xf]
  %v569 = vld [vmem:[%s3 + $0x3c] sm:$0xf]
  %v570 = vld [vmem:[%s4 + $0x2] sm:$0x1]
  %v571 = vperm.slane %v570, 0
  %v588 = vunpack.c.l.b16 %v554
  %v589 = vunpack.c.l.b16 %v555
  %v590 = vunpack.c.l.b16 %v556
  %v591 = vunpack.c.l.b16 %v557
  %v592 = vunpack.c.l.b16 %v558
  %v593 = vunpack.c.l.b16 %v559
  %v594 = vunpack.c.l.b16 %v560
  %v595 = vunpack.c.l.b16 %v561
  %v596 = vunpack.c.l.b16 %v562
  %v597 = vunpack.c.l.b16 %v563
  %v598 = vunpack.c.l.b16 %v564
  %v599 = vunpack.c.l.b16 %v565
  %v600 = vunpack.c.l.b16 %v566
  %v601 = vunpack.c.l.b16 %v567
  %v602 = vunpack.c.l.b16 %v568
  %v603 = vunpack.c.l.b16 %v569
  %v604 = vpack.c.b16 %v589, %v588
  %v605 = vpack.c.b16 %v591, %v590
  %v606 = vpack.c.b16 %v593, %v592
  %v607 = vpack.c.b16 %v595, %v594
  %v608 = vpack.c.b16 %v597, %v596
  %v609 = vpack.c.b16 %v599, %v598
  %v610 = vpack.c.b16 %v601, %v600
  %v611 = vpack.c.b16 %v603, %v602
  %620 = vmatpush.bf16.msra.mxu0 %v611
  %621 = vmatpush.bf16.msra.mxu0 %v610
  %622 = vmatpush.bf16.msra.mxu0 %v609
  %623 = vmatpush.bf16.msra.mxu0 %v608
  %624 = vmatpush.bf16.msra.mxu0 %v607
  %625 = vmatpush.bf16.msra.mxu0 %v606
  %626 = vmatpush.bf16.msra.mxu0 %v605
  %627 = vmatpush.bf16.msra.mxu0 %v604
  %628 = vmatmul.bf16.gmra.mxu0 %v538
  %v629 = vpop.f32.mrf.mxu0
  %v630 = vadd.f32 %v571, %v629
  %v631 = vpop.f32.mrf.mxu0
  %v632 = vadd.f32 %v571, %v631
  %633 = vmatmul.bf16.gmra.mxu0 %v539
  %v634 = vpop.f32.mrf.mxu0
  %v635 = vadd.f32 %v571, %v634
  %v636 = vpop.f32.mrf.mxu0
  %v637 = vadd.f32 %v571, %v636
  %638 = vmatmul.bf16.gmra.mxu0 %v540
  %v639 = vpop.f32.mrf.mxu0
  %v640 = vadd.f32 %v571, %v639
  %v641 = vpop.f32.mrf.mxu0
  %v642 = vadd.f32 %v571, %v641
  %643 = vmatmul.bf16.gmra.mxu0 %v541
  %v644 = vpop.f32.mrf.mxu0
  %v645 = vadd.f32 %v571, %v644
  %v646 = vpop.f32.mrf.mxu0
  %v647 = vadd.f32 %v571, %v646
  %648 = vmatmul.bf16.gmra.mxu0 %v542
  %v649 = vpop.f32.mrf.mxu0
  %v650 = vadd.f32 %v571, %v649
  %v651 = vpop.f32.mrf.mxu0
  %v652 = vadd.f32 %v571, %v651
  %653 = vmatmul.bf16.gmra.mxu0 %v543
  %v654 = vpop.f32.mrf.mxu0
  %v655 = vadd.f32 %v571, %v654
  %v656 = vpop.f32.mrf.mxu0
  %v657 = vadd.f32 %v571, %v656
  %658 = vmatmul.bf16.gmra.mxu0 %v544
  %v659 = vpop.f32.mrf.mxu0
  %v660 = vadd.f32 %v571, %v659
  %v661 = vpop.f32.mrf.mxu0
  %v662 = vadd.f32 %v571, %v661
  %663 = vmatmul.bf16.gmra.mxu0 %v545
  %v664 = vpop.f32.mrf.mxu0
  %v665 = vadd.f32 %v571, %v664
  %v666 = vpop.f32.mrf.mxu0
  %v667 = vadd.f32 %v571, %v666
  %668 = vmatmul.bf16.gmra.mxu0 %v546
  %v669 = vpop.f32.mrf.mxu0
  %v670 = vadd.f32 %v571, %v669
  %v671 = vpop.f32.mrf.mxu0
  %v672 = vadd.f32 %v571, %v671
  %673 = vmatmul.bf16.gmra.mxu0 %v547
  %v674 = vpop.f32.mrf.mxu0
  %v675 = vadd.f32 %v571, %v674
  %v676 = vpop.f32.mrf.mxu0
  %v677 = vadd.f32 %v571, %v676
  %678 = vmatmul.bf16.gmra.mxu0 %v548
  %v679 = vpop.f32.mrf.mxu0
  %v680 = vadd.f32 %v571, %v679
  %v681 = vpop.f32.mrf.mxu0
  %v682 = vadd.f32 %v571, %v681
  %683 = vmatmul.bf16.gmra.mxu0 %v549
  %v684 = vpop.f32.mrf.mxu0
  %v685 = vadd.f32 %v571, %v684
  %v686 = vpop.f32.mrf.mxu0
  %v687 = vadd.f32 %v571, %v686
  %688 = vmatmul.bf16.gmra.mxu0 %v550
  %v689 = vpop.f32.mrf.mxu0
  %v690 = vadd.f32 %v571, %v689
  %v691 = vpop.f32.mrf.mxu0
  %v692 = vadd.f32 %v571, %v691
  %693 = vmatmul.bf16.gmra.mxu0 %v551
  %v694 = vpop.f32.mrf.mxu0
  %v695 = vadd.f32 %v571, %v694
  %v696 = vpop.f32.mrf.mxu0
  %v697 = vadd.f32 %v571, %v696
  %698 = vmatmul.bf16.gmra.mxu0 %v552
  %v699 = vpop.f32.mrf.mxu0
  %v700 = vadd.f32 %v571, %v699
  %v701 = vpop.f32.mrf.mxu0
  %v702 = vadd.f32 %v571, %v701
  %703 = vmatmul.bf16.gmra.mxu0 %v553
  %v704 = vpop.f32.mrf.mxu0
  %v705 = vadd.f32 %v571, %v704
  %v706 = vpop.f32.mrf.mxu0
  %v707 = vadd.f32 %v571, %v706
  %708 = vdwg.mxu0
  %709 = vst [vmem:[%s5] sm:$0xff] %v630
  %710 = vst [vmem:[%s5 + $0x8] sm:$0xff] %v632
  %711 = vst [vmem:[%s5 + $0x10] sm:$0xff] %v635
  %712 = vst [vmem:[%s5 + $0x18] sm:$0xff] %v637
  %713 = vst [vmem:[%s5 + $0x20] sm:$0xff] %v640
  %714 = vst [vmem:[%s5 + $0x28] sm:$0xff] %v642
  %715 = vst [vmem:[%s5 + $0x30] sm:$0xff] %v645
  %716 = vst [vmem:[%s5 + $0x38] sm:$0xff] %v647
  %717 = vst [vmem:[%s5 + $0x40] sm:$0xff] %v650
  %718 = vst [vmem:[%s5 + $0x48] sm:$0xff] %v652
  %719 = vst [vmem:[%s5 + $0x50] sm:$0xff] %v655
  %720 = vst [vmem:[%s5 + $0x58] sm:$0xff] %v657
  %721 = vst [vmem:[%s5 + $0x60] sm:$0xff] %v660
  %722 = vst [vmem:[%s5 + $0x68] sm:$0xff] %v662
  %723 = vst [vmem:[%s5 + $0x70] sm:$0xff] %v665
  %724 = vst [vmem:[%s5 + $0x78] sm:$0xff] %v667
  %725 = vst [vmem:[%s5 + $0x80] sm:$0xff] %v670
  %726 = vst [vmem:[%s5 + $0x88] sm:$0xff] %v672
  %727 = vst [vmem:[%s5 + $0x90] sm:$0xff] %v675
  %728 = vst [vmem:[%s5 + $0x98] sm:$0xff] %v677
  %729 = vst [vmem:[%s5 + $0xa0] sm:$0xff] %v680
  %730 = vst [vmem:[%s5 + $0xa8] sm:$0xff] %v682
  %731 = vst [vmem:[%s5 + $0xb0] sm:$0xff] %v685
  %732 = vst [vmem:[%s5 + $0xb8] sm:$0xff] %v687
  %733 = vst [vmem:[%s5 + $0xc0] sm:$0xff] %v690
  %734 = vst [vmem:[%s5 + $0xc8] sm:$0xff] %v692
  %735 = vst [vmem:[%s5 + $0xd0] sm:$0xff] %v695
  %736 = vst [vmem:[%s5 + $0xd8] sm:$0xff] %v697
  %737 = vst [vmem:[%s5 + $0xe0] sm:$0xff] %v700
  %738 = vst [vmem:[%s5 + $0xe8] sm:$0xff] %v702
  %739 = vst [vmem:[%s5 + $0xf0] sm:$0xff] %v705
  %740 = vst [vmem:[%s5 + $0xf8] sm:$0xff] %v707
  // Predicated region
  $region22: #{encoder_forward.1} parent=0 // pred_check
    _
  $region23: #{encoder_forward.1} parent=0 // pred_check_branch
    %742 = sbr.rel (0) target = $region25
  $region24: #{encoder_forward.1} parent=0 // pred_region
    _
  $region25: #{encoder_forward.1} parent=0 // pred_fallthru
    _
  // Predicated region
  $region26: #{encoder_forward.1} parent=0 // pred_check
    _
  $region27: #{encoder_forward.1} parent=0 // pred_check_branch
    %744 = sbr.rel (0) target = $region29
  $region28: #{encoder_forward.1} parent=0 // pred_region
    _
  $region29: #{encoder_forward.1} parent=0 // pred_fallthru
    _

</llo_original>
